<compile_context>
chip_gen: v5e
topology: v5e:2x2
jax: 0.10.0
libtpu: 0.0.40
codegen_flags: <defaults>
</compile_context>

<pallas_src>
import functools

import jax
import jax.numpy as jnp
from jax import lax
from jax.experimental import pallas as pl
from jax.experimental.pallas import tpu as pltpu


def _make_resblock_kernel(H, L):
    """Kernel over one (H, L) activation slab, L = images_per_step * W * C."""

    def kernel(x_ref, w1_ref, b1_ref, w2_ref, b2_ref, o_ref):
        x = x_ref[...].astype(jnp.float32)                      # (H, L): conv input + residual
        mxu_dtype = w1_ref.dtype
        zrow = jnp.zeros((1, L), jnp.float32)

        def im2col_rows(a):
            # Row-shifted copies for the dy = -1 / 0 / +1 taps (zero top/bottom halo).
            up = jnp.concatenate([zrow, a[:-1, :]], axis=0)     # row h sees a[h-1]
            down = jnp.concatenate([a[1:, :], zrow], axis=0)    # row h sees a[h+1]
            return jnp.concatenate([up, a, down], axis=1)       # (H, 3L)

        # conv1 + bias + ReLU: one deep (H,3L)x(3L,L) matmul, f32 accumulate.
        h = jnp.dot(im2col_rows(x).astype(mxu_dtype), w1_ref[...],
                    preferred_element_type=jnp.float32)
        h = jnp.maximum(h + b1_ref[...], 0.0)

        # conv2 + bias + residual; h never leaves vregs (no VMEM scratch round trip).
        y = jnp.dot(im2col_rows(h).astype(mxu_dtype), w2_ref[...],
                    preferred_element_type=jnp.float32)
        y = y + b2_ref[...] + x

        o_ref[...] = y.astype(o_ref.dtype)

    return kernel


def _pack_conv_weight(w_hwio, n_img, W, dtype):
    """(3,3,Cin,Cout) HWIO -> (3L, L) slab, L = n_img * W * C.

    Row block ky in {0,1,2} multiplies the activation slab shifted by dy = ky - 1
    rows.  Within each block the dx in {-1,0,+1} taps form a banded block matrix
    over the n_img*W lane positions; taps that would cross an image's left/right
    edge (the "SAME" halo) are simply left as zeros.
    """
    C = w_hwio.shape[-1]
    P = n_img * W
    L = P * C
    pos = jnp.arange(P)
    w = w_hwio.astype(jnp.float32)

    row_blocks = []
    for ky in range(3):
        blk = jnp.zeros((P, C, P, C), jnp.float32)
        for kx in range(3):
            dx = kx - 1
            src = pos + dx                                     # source position per output column
            valid = (src >= 0) & (src < P) & (src // W == pos // W)
            place = ((pos[:, None] == src[None, :]) & valid[None, :]).astype(jnp.float32)
            blk = blk + jnp.einsum("pq,io->piqo", place, w[ky, kx])
        row_blocks.append(blk.reshape(L, L))
    return jnp.concatenate(row_blocks, axis=0).astype(dtype)    # (3L, L)


def _images_per_step(N, H, W, C, itemsize=4):
    """Images folded into one grid step (lane block = nb*W*C lanes).

    Fold as much of the batch as possible (amortizes per-step overhead, keeps the
    lane dim dense) while keeping the activation block and the packed (3L, L)
    weight slab comfortably inside VMEM even on v7x (64 MiB)."""
    act_budget = 8 << 20
    w_budget = 16 << 20
    for nb in range(N, 0, -1):
        if N % nb:
            continue
        L = nb * W * C
        if H * L * itemsize > act_budget or 3 * L * L * itemsize > w_budget:
            continue
        if nb == N or L % 128 == 0:
            return nb
    # TODO(synk): for very large W*C the banded weight packing stops being the right
    # trade-off; switch to per-tap (C,C) matmuls with C padded to 128 and H-row tiling.
    return N


@functools.partial(jax.jit, static_argnames=("mxu_dtype",))
def resblock_forward(x_nchw, w1, b1, w2, b2, mxu_dtype=jnp.bfloat16):
    """ResBlock forward.  x: (N,C,H,W) like PyTorch; w*: (3,3,C,C) HWIO; b*: (C,)."""
    N, C, H, W = x_nchw.shape

    nb = _images_per_step(N, H, W, C)
    L = nb * W * C
    num_steps = (N * W * C) // L

    # channels-last with the batch folded into the lane dimension: (H, N*W*C).
    x2d = jnp.transpose(x_nchw, (2, 0, 3, 1)).reshape(H, N * W * C)

    w1p = _pack_conv_weight(w1, nb, W, mxu_dtype)               # (3L, L)
    w2p = _pack_conv_weight(w2, nb, W, mxu_dtype)
    b1p = jnp.tile(b1.astype(jnp.float32), nb * W).reshape(1, L)
    b2p = jnp.tile(b2.astype(jnp.float32), nb * W).reshape(1, L)

    out2d = pl.pallas_call(
        _make_resblock_kernel(H, L),
        out_shape=jax.ShapeDtypeStruct((H, N * W * C), x_nchw.dtype),
        grid_spec=pltpu.PrefetchScalarGridSpec(
            num_scalar_prefetch=0,
            grid=(num_steps,),
            in_specs=[
                pl.BlockSpec((H, L), lambda i: (0, i)),         # activation slab
                pl.BlockSpec((3 * L, L), lambda i: (0, 0)),     # packed conv1 weight
                pl.BlockSpec((1, L), lambda i: (0, 0)),         # conv1 bias row
                pl.BlockSpec((3 * L, L), lambda i: (0, 0)),     # packed conv2 weight
                pl.BlockSpec((1, L), lambda i: (0, 0)),         # conv2 bias row
            ],
            out_specs=pl.BlockSpec((H, L), lambda i: (0, i)),
        ),
        compiler_params=pltpu.CompilerParams(
            # batch-chunk axis is independent work (megacore / 2-TC friendly when N is larger)
            dimension_semantics=("parallel",),
        ),
    )(x2d, w1p, b1p, w2p, b2p)

    # (H, N*W*C) -> (N, C, H, W)
    return jnp.transpose(out2d.reshape(H, N, W, C), (1, 3, 0, 2))


def resblock_reference(x_nchw, w1, b1, w2, b2):
    """Pure-JAX reference (lax conv) for correctness checking."""
    x = jnp.transpose(x_nchw, (0, 2, 3, 1))
    dn = lax.conv_dimension_numbers(x.shape, w1.shape, ("NHWC", "HWIO", "NHWC"))
    h = lax.conv_general_dilated(x, w1, (1, 1), "SAME", dimension_numbers=dn) + b1
    h = jnp.maximum(h, 0.0)
    y = lax.conv_general_dilated(h, w2, (1, 1), "SAME", dimension_numbers=dn) + b2
    return jnp.transpose(x + y, (0, 3, 1, 2))


if __name__ == "__main__":
    N, C, H, W = 2, 4, 16, 16
    key = jax.random.PRNGKey(0)
    kx, k1, kb1, k2, kb2 = jax.random.split(key, 5)

    x = jax.random.normal(kx, (N, C, H, W), jnp.float32)
    # deterministic "Conv2d(channels, channels, 3, padding=1)" params (HWIO)
    fan_in = C * 3 * 3
    bound = 1.0 / (fan_in ** 0.5)
    w1 = jax.random.uniform(k1, (3, 3, C, C), jnp.float32, -bound, bound)
    b1 = jax.random.uniform(kb1, (C,), jnp.float32, -bound, bound)
    w2 = jax.random.uniform(k2, (3, 3, C, C), jnp.float32, -bound, bound)
    b2 = jax.random.uniform(kb2, (C,), jnp.float32, -bound, bound)

    ref = jax.block_until_ready(resblock_reference(x, w1, b1, w2, b2))

    # strict check with f32 MXU inputs
    out_f32 = jax.block_until_ready(
        resblock_forward(x, w1, b1, w2, b2, mxu_dtype=jnp.float32))
    assert out_f32.shape == (N, C, H, W)
    assert jnp.allclose(out_f32, ref, atol=1e-4, rtol=1e-4), "f32 path mismatch vs reference"

    # default perf path: bf16 inputs at the MXU (f32 accumulate), looser tolerance
    out_bf16 = jax.block_until_ready(
        resblock_forward(x, w1, b1, w2, b2, mxu_dtype=jnp.bfloat16))
    assert jnp.allclose(out_bf16, ref, atol=2e-2, rtol=2e-2), "bf16 path mismatch vs reference"

    print("KERNEL_OK")
</pallas_src>

<mosaic_0001>
module attributes {stable_mosaic.version = 11 : i64} {
  func.func @kernel(%arg0: i32, %arg1: memref<16x128xf32, #tpu.memory_space<vmem>>, %arg2: memref<384x128xf32, #tpu.memory_space<vmem>>, %arg3: memref<1x128xf32, #tpu.memory_space<vmem>>, %arg4: memref<384x128xf32, #tpu.memory_space<vmem>>, %arg5: memref<1x128xf32, #tpu.memory_space<vmem>>, %arg6: memref<16x128xf32, #tpu.memory_space<vmem>>) attributes {dimension_semantics = [#tpu.dimension_semantics<parallel>], iteration_bounds = array<i64: 1>, scalar_prefetch = 0 : i64, scratch_operands = 0 : i64, tpu.core_type = #tpu.core_type<tc>, window_params = [{transform_indices = @transform_0, window_bounds = array<i64: 16, 128>}, {pipeline_mode = #tpu.pipeline_mode<synchronous>, transform_indices = @transform_1, window_bounds = array<i64: 384, 128>}, {pipeline_mode = #tpu.pipeline_mode<synchronous>, transform_indices = @transform_2, window_bounds = array<i64: 1, 128>}, {pipeline_mode = #tpu.pipeline_mode<synchronous>, transform_indices = @transform_3, window_bounds = array<i64: 384, 128>}, {pipeline_mode = #tpu.pipeline_mode<synchronous>, transform_indices = @transform_4, window_bounds = array<i64: 1, 128>}, {transform_indices = @transform_5, window_bounds = array<i64: 16, 128>}]} {
    %c0 = arith.constant 0 : index
    %c0_0 = arith.constant 0 : index
    %0 = vector.load %arg1[%c0, %c0_0] : memref<16x128xf32, #tpu.memory_space<vmem>>, vector<16x128xf32>
    %cst = arith.constant 0.000000e+00 : f32
    %1 = vector.broadcast %cst : f32 to vector<1x128xf32>
    %2 = vector.extract_strided_slice %0 {offsets = [0, 0], sizes = [15, 128], strides = [1, 1]} : vector<16x128xf32> to vector<15x128xf32>
    %3 = tpu.concatenate %1, %2 in 0 : vector<1x128xf32>, vector<15x128xf32> -> vector<16x128xf32>
    %4 = vector.extract_strided_slice %0 {offsets = [1, 0], sizes = [15, 128], strides = [1, 1]} : vector<16x128xf32> to vector<15x128xf32>
    %5 = tpu.concatenate %4, %1 in 0 : vector<15x128xf32>, vector<1x128xf32> -> vector<16x128xf32>
    %6 = tpu.concatenate %3, %0, %5 in 1 : vector<16x128xf32>, vector<16x128xf32>, vector<16x128xf32> -> vector<16x384xf32>
    %c0_1 = arith.constant 0 : index
    %c0_2 = arith.constant 0 : index
    %7 = vector.load %arg2[%c0_1, %c0_2] : memref<384x128xf32, #tpu.memory_space<vmem>>, vector<384x128xf32>
    %cst_3 = arith.constant dense<0.000000e+00> : vector<16x128xf32>
    %8 = tpu.matmul %6, %7, %cst_3 {dimension_numbers = #tpu.dot_dimension_numbers<[1], [0], [0], [1], [0, 0, 1, 1], [], []>} : vector<16x384xf32>, vector<384x128xf32>, vector<16x128xf32> -> vector<16x128xf32>
    %c0_4 = arith.constant 0 : index
    %c0_5 = arith.constant 0 : index
    %9 = vector.load %arg3[%c0_4, %c0_5] : memref<1x128xf32, #tpu.memory_space<vmem>>, vector<1x128xf32>
    %10 = vector.broadcast %9 : vector<1x128xf32> to vector<16x128xf32>
    %11 = arith.addf %8, %10 : vector<16x128xf32>
    %cst_6 = arith.constant 0.000000e+00 : f32
    %12 = vector.broadcast %cst_6 : f32 to vector<16x128xf32>
    %13 = arith.maximumf %11, %12 : vector<16x128xf32>
    %14 = vector.extract_strided_slice %13 {offsets = [0, 0], sizes = [15, 128], strides = [1, 1]} : vector<16x128xf32> to vector<15x128xf32>
    %15 = tpu.concatenate %1, %14 in 0 : vector<1x128xf32>, vector<15x128xf32> -> vector<16x128xf32>
    %16 = vector.extract_strided_slice %13 {offsets = [1, 0], sizes = [15, 128], strides = [1, 1]} : vector<16x128xf32> to vector<15x128xf32>
    %17 = tpu.concatenate %16, %1 in 0 : vector<15x128xf32>, vector<1x128xf32> -> vector<16x128xf32>
    %18 = tpu.concatenate %15, %13, %17 in 1 : vector<16x128xf32>, vector<16x128xf32>, vector<16x128xf32> -> vector<16x384xf32>
    %c0_7 = arith.constant 0 : index
    %c0_8 = arith.constant 0 : index
    %19 = vector.load %arg4[%c0_7, %c0_8] : memref<384x128xf32, #tpu.memory_space<vmem>>, vector<384x128xf32>
    %cst_9 = arith.constant dense<0.000000e+00> : vector<16x128xf32>
    %20 = tpu.matmul %18, %19, %cst_9 {dimension_numbers = #tpu.dot_dimension_numbers<[1], [0], [0], [1], [0, 0, 1, 1], [], []>} : vector<16x384xf32>, vector<384x128xf32>, vector<16x128xf32> -> vector<16x128xf32>
    %c0_10 = arith.constant 0 : index
    %c0_11 = arith.constant 0 : index
    %21 = vector.load %arg5[%c0_10, %c0_11] : memref<1x128xf32, #tpu.memory_space<vmem>>, vector<1x128xf32>
    %22 = vector.broadcast %21 : vector<1x128xf32> to vector<16x128xf32>
    %23 = arith.addf %20, %22 : vector<16x128xf32>
    %24 = arith.addf %23, %0 : vector<16x128xf32>
    %c0_12 = arith.constant 0 : index
    %c0_13 = arith.constant 0 : index
    %25 = vector.load %arg6[%c0_12, %c0_13] : memref<16x128xf32, #tpu.memory_space<vmem>>, vector<16x128xf32>
    tpu.vector_store %arg6[%c0_12, %c0_13], %24 {strides = array<i32>} : memref<16x128xf32, #tpu.memory_space<vmem>>, vector<16x128xf32>,
    return
  }
  func.func @transform_0(%arg0: i32) -> (i32, i32) {
    %c0_i32 = arith.constant 0 : i32
    %c0_i32_0 = arith.constant 0 : i32
    return %c0_i32, %arg0 : i32, i32
  }
  func.func @transform_1(%arg0: i32) -> (i32, i32) {
    %c0_i32 = arith.constant 0 : i32
    %c0_i32_0 = arith.constant 0 : i32
    %c0_i32_1 = arith.constant 0 : i32
    return %c0_i32, %c0_i32_0 : i32, i32
  }
  func.func @transform_2(%arg0: i32) -> (i32, i32) {
    %c0_i32 = arith.constant 0 : i32
    %c0_i32_0 = arith.constant 0 : i32
    %c0_i32_1 = arith.constant 0 : i32
    return %c0_i32, %c0_i32_0 : i32, i32
  }
  func.func @transform_3(%arg0: i32) -> (i32, i32) {
    %c0_i32 = arith.constant 0 : i32
    %c0_i32_0 = arith.constant 0 : i32
    %c0_i32_1 = arith.constant 0 : i32
    return %c0_i32, %c0_i32_0 : i32, i32
  }
  func.func @transform_4(%arg0: i32) -> (i32, i32) {
    %c0_i32 = arith.constant 0 : i32
    %c0_i32_0 = arith.constant 0 : i32
    %c0_i32_1 = arith.constant 0 : i32
    return %c0_i32, %c0_i32_0 : i32, i32
  }
  func.func @transform_5(%arg0: i32) -> (i32, i32) {
    %c0_i32 = arith.constant 0 : i32
    %c0_i32_0 = arith.constant 0 : i32
    return %c0_i32, %arg0 : i32, i32
  }
}

</mosaic_0001>

<llo_original>
// kernel: tile.13
$region0: #{tile.13}
  #allocation0 [shape = 's32[1]{0}', space=sflag, size = 0x4, scoped, tag = 'scoped memory for tile.13']
  %s0 = inlined_call_operand.vmem [shape: f32[4], index: 0, kind: input, shape index: {}]
  %s1 = inlined_call_operand.vmem [shape: f32[32,4], index: 1, kind: output, shape index: {}]
  // Predicated region
  $region2: #{tile.13} parent=0 // pred_check
    _
  $region3: #{tile.13} parent=0 // pred_check_branch
    %3 = sbr.rel (0) target = $region5
  $region4: #{tile.13} parent=0 // pred_region
    _
  $region5: #{tile.13} parent=0 // pred_fallthru
    _
  %v4 = vld [vmem:[%s0] ss:$0 sm:$0xff]
  %5 = vst [vmem:[%s1] sm:$0xff] %v4
  %s6 = scalar_lea.vmem %s1, 8
  %7 = vst [vmem:[%s6] sm:$0xff] %v4
  %s8 = scalar_lea.vmem %s1, 16
  %9 = vst [vmem:[%s8] sm:$0xff] %v4
  %s10 = scalar_lea.vmem %s1, 24
  %11 = vst [vmem:[%s10] sm:$0xff] %v4

// kernel: tile.14
$region0: #{tile.14}
  %s0 = inlined_call_operand.vmem [shape: f32[32,4], index: 0, kind: input, shape index: {}]
  %s1 = inlined_call_operand.vmem [shape: f32[1,128], index: 1, kind: output, shape index: {}]
  $region1: #{tile.14} parent=0
    #allocation0 [shape = 'u8[4096]{0}', space=vmem, size = 0x1000, scoped, tag = 'scoped mem for output reshape']
    %v2 = vld [vmem:[%s0] sm:$0x1]
    %vm3 = vcmask 31744
    %4 = vst.msk [vmem:[#allocation0] sm:$0x1] %vm3, %v2
    %s5 = scalar_lea.vmem %s0, 31
    %v6 = vld [vmem:[%s5] sm:$0x1]
    %7 = vrot.lane.b32.xlu0 %v6, 124
    %v8 = vpop.permute.xlu0 %7
    %vm9 = vcmask 1048544
    %10 = vst.msk [vmem:[#allocation0] sm:$0x1] %vm9, %v8
    %s11 = scalar_lea.vmem %s0, 30
    %v12 = vld [vmem:[%s11] sm:$0x1]
    %13 = vrot.lane.b32.xlu0 %v12, 120
    %v14 = vpop.permute.xlu0 %13
    %vm15 = vcmask 1015744
    %16 = vst.msk [vmem:[#allocation0] sm:$0x1] %vm15, %v14
    %s17 = scalar_lea.vmem %s0, 29
    %v18 = vld [vmem:[%s17] sm:$0x1]
    %19 = vrot.lane.b32.xlu0 %v18, 116
    %v20 = vpop.permute.xlu0 %19
    %vm21 = vcmask 982944
    %22 = vst.msk [vmem:[#allocation0] sm:$0x1] %vm21, %v20
    %s23 = scalar_lea.vmem %s0, 28
    %v24 = vld [vmem:[%s23] sm:$0x1]
    %25 = vrot.lane.b32.xlu0 %v24, 112
    %v26 = vpop.permute.xlu0 %25
    %vm27 = vcmask 950144
    %28 = vst.msk [vmem:[#allocation0] sm:$0x1] %vm27, %v26
    %s29 = scalar_lea.vmem %s0, 27
    %v30 = vld [vmem:[%s29] sm:$0x1]
    %31 = vrot.lane.b32.xlu0 %v30, 108
    %v32 = vpop.permute.xlu0 %31
    %vm33 = vcmask 917344
    %34 = vst.msk [vmem:[#allocation0] sm:$0x1] %vm33, %v32
    %s35 = scalar_lea.vmem %s0, 26
    %v36 = vld [vmem:[%s35] sm:$0x1]
    %37 = vrot.lane.b32.xlu0 %v36, 104
    %v38 = vpop.permute.xlu0 %37
    %vm39 = vcmask 884544
    %40 = vst.msk [vmem:[#allocation0] sm:$0x1] %vm39, %v38
    %s41 = scalar_lea.vmem %s0, 25
    %v42 = vld [vmem:[%s41] sm:$0x1]
    %43 = vrot.lane.b32.xlu0 %v42, 100
    %v44 = vpop.permute.xlu0 %43
    %vm45 = vcmask 851744
    %46 = vst.msk [vmem:[#allocation0] sm:$0x1] %vm45, %v44
    %s47 = scalar_lea.vmem %s0, 24
    %v48 = vld [vmem:[%s47] sm:$0x1]
    %49 = vrot.lane.b32.xlu0 %v48, 96
    %v50 = vpop.permute.xlu0 %49
    %vm51 = vcmask 818944
    %52 = vst.msk [vmem:[#allocation0] sm:$0x1] %vm51, %v50
    %s53 = scalar_lea.vmem %s0, 23
    %v54 = vld [vmem:[%s53] sm:$0x1]
    %55 = vrot.lane.b32.xlu0 %v54, 92
    %v56 = vpop.permute.xlu0 %55
    %vm57 = vcmask 786144
    %58 = vst.msk [vmem:[#allocation0] sm:$0x1] %vm57, %v56
    %s59 = scalar_lea.vmem %s0, 22
    %v60 = vld [vmem:[%s59] sm:$0x1]
    %61 = vrot.lane.b32.xlu0 %v60, 88
    %v62 = vpop.permute.xlu0 %61
    %vm63 = vcmask 753344
    %64 = vst.msk [vmem:[#allocation0] sm:$0x1] %vm63, %v62
    %s65 = scalar_lea.vmem %s0, 21
    %v66 = vld [vmem:[%s65] sm:$0x1]
    %67 = vrot.lane.b32.xlu0 %v66, 84
    %v68 = vpop.permute.xlu0 %67
    %vm69 = vcmask 720544
    %70 = vst.msk [vmem:[#allocation0] sm:$0x1] %vm69, %v68
    %s71 = scalar_lea.vmem %s0, 20
    %v72 = vld [vmem:[%s71] sm:$0x1]
    %73 = vrot.lane.b32.xlu0 %v72, 80
    %v74 = vpop.permute.xlu0 %73
    %vm75 = vcmask 687744
    %76 = vst.msk [vmem:[#allocation0] sm:$0x1] %vm75, %v74
    %s77 = scalar_lea.vmem %s0, 19
    %v78 = vld [vmem:[%s77] sm:$0x1]
    %79 = vrot.lane.b32.xlu0 %v78, 76
    %v80 = vpop.permute.xlu0 %79
    %vm81 = vcmask 654944
    %82 = vst.msk [vmem:[#allocation0] sm:$0x1] %vm81, %v80
    %s83 = scalar_lea.vmem %s0, 18
    %v84 = vld [vmem:[%s83] sm:$0x1]
    %85 = vrot.lane.b32.xlu0 %v84, 72
    %v86 = vpop.permute.xlu0 %85
    %vm87 = vcmask 622144
    %88 = vst.msk [vmem:[#allocation0] sm:$0x1] %vm87, %v86
    %s89 = scalar_lea.vmem %s0, 17
    %v90 = vld [vmem:[%s89] sm:$0x1]
    %91 = vrot.lane.b32.xlu0 %v90, 68
    %v92 = vpop.permute.xlu0 %91
    %vm93 = vcmask 589344
    %94 = vst.msk [vmem:[#allocation0] sm:$0x1] %vm93, %v92
    %s95 = scalar_lea.vmem %s0, 16
    %v96 = vld [vmem:[%s95] sm:$0x1]
    %97 = vrot.lane.b32.xlu0 %v96, 64
    %v98 = vpop.permute.xlu0 %97
    %vm99 = vcmask 556544
    %100 = vst.msk [vmem:[#allocation0] sm:$0x1] %vm99, %v98
    %s101 = scalar_lea.vmem %s0, 15
    %v102 = vld [vmem:[%s101] sm:$0x1]
    %103 = vrot.lane.b32.xlu0 %v102, 60
    %v104 = vpop.permute.xlu0 %103
    %vm105 = vcmask 523744
    %106 = vst.msk [vmem:[#allocation0] sm:$0x1] %vm105, %v104
    %s107 = scalar_lea.vmem %s0, 14
    %v108 = vld [vmem:[%s107] sm:$0x1]
    %109 = vrot.lane.b32.xlu0 %v108, 56
    %v110 = vpop.permute.xlu0 %109
    %vm111 = vcmask 490944
    %112 = vst.msk [vmem:[#allocation0] sm:$0x1] %vm111, %v110
    %s113 = scalar_lea.vmem %s0, 13
    %v114 = vld [vmem:[%s113] sm:$0x1]
    %115 = vrot.lane.b32.xlu0 %v114, 52
    %v116 = vpop.permute.xlu0 %115
    %vm117 = vcmask 458144
    %118 = vst.msk [vmem:[#allocation0] sm:$0x1] %vm117, %v116
    %s119 = scalar_lea.vmem %s0, 12
    %v120 = vld [vmem:[%s119] sm:$0x1]
    %121 = vrot.lane.b32.xlu0 %v120, 48
    %v122 = vpop.permute.xlu0 %121
    %vm123 = vcmask 425344
    %124 = vst.msk [vmem:[#allocation0] sm:$0x1] %vm123, %v122
    %s125 = scalar_lea.vmem %s0, 11
    %v126 = vld [vmem:[%s125] sm:$0x1]
    %127 = vrot.lane.b32.xlu0 %v126, 44
    %v128 = vpop.permute.xlu0 %127
    %vm129 = vcmask 392544
    %130 = vst.msk [vmem:[#allocation0] sm:$0x1] %vm129, %v128
    %s131 = scalar_lea.vmem %s0, 10
    %v132 = vld [vmem:[%s131] sm:$0x1]
    %133 = vrot.lane.b32.xlu0 %v132, 40
    %v134 = vpop.permute.xlu0 %133
    %vm135 = vcmask 359744
    %136 = vst.msk [vmem:[#allocation0] sm:$0x1] %vm135, %v134
    %s137 = scalar_lea.vmem %s0, 9
    %v138 = vld [vmem:[%s137] sm:$0x1]
    %139 = vrot.lane.b32.xlu0 %v138, 36
    %v140 = vpop.permute.xlu0 %139
    %vm141 = vcmask 326944
    %142 = vst.msk [vmem:[#allocation0] sm:$0x1] %vm141, %v140
    %s143 = scalar_lea.vmem %s0, 8
    %v144 = vld [vmem:[%s143] sm:$0x1]
    %145 = vrot.lane.b32.xlu0 %v144, 32
    %v146 = vpop.permute.xlu0 %145
    %vm147 = vcmask 294144
    %148 = vst.msk [vmem:[#allocation0] sm:$0x1] %vm147, %v146
    %s149 = scalar_lea.vmem %s0, 7
    %v150 = vld [vmem:[%s149] sm:$0x1]
    %151 = vrot.lane.b32.xlu0 %v150, 28
    %v152 = vpop.permute.xlu0 %151
    %vm153 = vcmask 261344
    %154 = vst.msk [vmem:[#allocation0] sm:$0x1] %vm153, %v152
    %s155 = scalar_lea.vmem %s0, 6
    %v156 = vld [vmem:[%s155] sm:$0x1]
    %157 = vrot.lane.b32.xlu0 %v156, 24
    %v158 = vpop.permute.xlu0 %157
    %vm159 = vcmask 228544
    %160 = vst.msk [vmem:[#allocation0] sm:$0x1] %vm159, %v158
    %s161 = scalar_lea.vmem %s0, 5
    %v162 = vld [vmem:[%s161] sm:$0x1]
    %163 = vrot.lane.b32.xlu0 %v162, 20
    %v164 = vpop.permute.xlu0 %163
    %vm165 = vcmask 195744
    %166 = vst.msk [vmem:[#allocation0] sm:$0x1] %vm165, %v164
    %s167 = scalar_lea.vmem %s0, 4
    %v168 = vld [vmem:[%s167] sm:$0x1]
    %169 = vrot.lane.b32.xlu0 %v168, 16
    %v170 = vpop.permute.xlu0 %169
    %vm171 = vcmask 162944
    %172 = vst.msk [vmem:[#allocation0] sm:$0x1] %vm171, %v170
    %s173 = scalar_lea.vmem %s0, 3
    %v174 = vld [vmem:[%s173] sm:$0x1]
    %175 = vrot.lane.b32.xlu0 %v174, 12
    %v176 = vpop.permute.xlu0 %175
    %vm177 = vcmask 130144
    %178 = vst.msk [vmem:[#allocation0] sm:$0x1] %vm177, %v176
    %s179 = scalar_lea.vmem %s0, 2
    %v180 = vld [vmem:[%s179] sm:$0x1]
    %181 = vrot.lane.b32.xlu0 %v180, 8
    %v182 = vpop.permute.xlu0 %181
    %vm183 = vcmask 97344
    %184 = vst.msk [vmem:[#allocation0] sm:$0x1] %vm183, %v182
    %s185 = scalar_lea.vmem %s0, 1
    %v186 = vld [vmem:[%s185] sm:$0x1]
    %187 = vrot.lane.b32.xlu0 %v186, 4
    %v188 = vpop.permute.xlu0 %187
    %vm189 = vcmask 64544
    %190 = vst.msk [vmem:[#allocation0] sm:$0x1] %vm189, %v188
    %s192 = ssub.s32 2, 1
    %v193 = vld [vmem:[#allocation0] sm:%s192]
    %s195 = ssub.s32 2, 1
    %196 = vst [vmem:[%s1] sm:%s195] %v193

// kernel: resblock_forward.1
$region0: #{resblock_forward.1}
  #allocation0 [shape = 'u32[]', space=smem, size = 0x4, offset = 0x4, fixed_abs, tag = 'smem constant byte address 0x4 - core index']
  #allocation1 [shape = 'u32[72,128]{1,0:T(1,128)}', space=vmem, size = 0x9000, scoped, tag = 'internal scratch']
  %s0 = inlined_call_operand.vmem [shape: f32[16,128], index: 0, kind: input, shape index: {}]
  %s1 = inlined_call_operand.vmem [shape: f32[384,128], index: 1, kind: input, shape index: {}]
  %s2 = inlined_call_operand.vmem [shape: f32[1,128], index: 2, kind: input, shape index: {}]
  %s3 = inlined_call_operand.vmem [shape: f32[384,128], index: 3, kind: input, shape index: {}]
  %s4 = inlined_call_operand.vmem [shape: f32[1,128], index: 4, kind: input, shape index: {}]
  %s5 = inlined_call_operand.vmem [shape: f32[16,128], index: 5, kind: output, shape index: {}]
  %s6 = sld [smem:[#allocation0]]
  $region30: #{resblock_forward.1} parent=0
    _
  %s8 = ssub.s32 1, %s6
  %s9 = scalar_select 0, %s8, %s6
  // Predicated region
  $region2: #{resblock_forward.1} parent=0 // pred_check
    _
  $region3: #{resblock_forward.1} parent=0 // pred_check_branch
    %11 = sbr.rel (0) target = $region5
  $region4: #{resblock_forward.1} parent=0 // pred_region
    _
  $region5: #{resblock_forward.1} parent=0 // pred_fallthru
    _
  // Predicated region
  $region6: #{resblock_forward.1} parent=0 // pred_check
    _
  $region7: #{resblock_forward.1} parent=0 // pred_check_branch
    %13 = sbr.rel (0) target = $region9
  $region8: #{resblock_forward.1} parent=0 // pred_region
    _
  $region9: #{resblock_forward.1} parent=0 // pred_fallthru
    _
  // Predicated region
  $region10: #{resblock_forward.1} parent=0 // pred_check
    _
  $region11: #{resblock_forward.1} parent=0 // pred_check_branch
    %15 = sbr.rel (0) target = $region13
  $region12: #{resblock_forward.1} parent=0 // pred_region
    _
  $region13: #{resblock_forward.1} parent=0 // pred_fallthru
    _
  // Predicated region
  $region14: #{resblock_forward.1} parent=0 // pred_check
    _
  $region15: #{resblock_forward.1} parent=0 // pred_check_branch
    %17 = sbr.rel (0) target = $region17
  $region16: #{resblock_forward.1} parent=0 // pred_region
    _
  $region17: #{resblock_forward.1} parent=0 // pred_fallthru
    _
  // Predicated region
  $region18: #{resblock_forward.1} parent=0 // pred_check
    _
  $region19: #{resblock_forward.1} parent=0 // pred_check_branch
    %19 = sbr.rel (0) target = $region21
  $region20: #{resblock_forward.1} parent=0 // pred_region
    _
  $region21: #{resblock_forward.1} parent=0 // pred_fallthru
    _
  %v20 = vld [vmem:[%s0] sm:$0xff]
  %v21 = vld [vmem:[%s0 + $0x8] sm:$0xff]
  %vm24 = vcmask 1040384
  %v25 = vrot.slane %v20, 7
  %v26 = vrot.slane %v21, 7
  %v27 = vsel %vm24, %v25, %v26
  %v30 = vsel %vm24, 0.0, %v25
  %vm31 = vcmask 1046528
  %v32 = vrot.slane %v20, 1
  %v33 = vrot.slane %v21, 1
  %v34 = vsel %vm31, %v32, %v33
  %v37 = vsel %vm31, %v33, 0.0
  %v38 = vld [vmem:[%s1] sm:$0xff]
  %v39 = vld [vmem:[%s1 + $0x8] sm:$0xff]
  %v40 = vld [vmem:[%s1 + $0x10] sm:$0xff]
  %v41 = vld [vmem:[%s1 + $0x18] sm:$0xff]
  %v42 = vld [vmem:[%s1 + $0x20] sm:$0xff]
  %v43 = vld [vmem:[%s1 + $0x28] sm:$0xff]
  %v44 = vld [vmem:[%s1 + $0x30] sm:$0xff]
  %v45 = vld [vmem:[%s1 + $0x38] sm:$0xff]
  %v46 = vld [vmem:[%s1 + $0x40] sm:$0xff]
  %v47 = vld [vmem:[%s1 + $0x48] sm:$0xff]
  %v48 = vld [vmem:[%s1 + $0x50] sm:$0xff]
  %v49 = vld [vmem:[%s1 + $0x58] sm:$0xff]
  %v50 = vld [vmem:[%s1 + $0x60] sm:$0xff]
  %v51 = vld [vmem:[%s1 + $0x68] sm:$0xff]
  %v52 = vld [vmem:[%s1 + $0x70] sm:$0xff]
  %v53 = vld [vmem:[%s1 + $0x78] sm:$0xff]
  %v54 = vld [vmem:[%s1 + $0x80] sm:$0xff]
  %v55 = vld [vmem:[%s1 + $0x88] sm:$0xff]
  %v56 = vld [vmem:[%s1 + $0x90] sm:$0xff]
  %v57 = vld [vmem:[%s1 + $0x98] sm:$0xff]
  %v58 = vld [vmem:[%s1 + $0xa0] sm:$0xff]
  %v59 = vld [vmem:[%s1 + $0xa8] sm:$0xff]
  %v60 = vld [vmem:[%s1 + $0xb0] sm:$0xff]
  %v61 = vld [vmem:[%s1 + $0xb8] sm:$0xff]
  %v62 = vld [vmem:[%s1 + $0xc0] sm:$0xff]
  %v63 = vld [vmem:[%s1 + $0xc8] sm:$0xff]
  %v64 = vld [vmem:[%s1 + $0xd0] sm:$0xff]
  %v65 = vld [vmem:[%s1 + $0xd8] sm:$0xff]
  %v66 = vld [vmem:[%s1 + $0xe0] sm:$0xff]
  %v67 = vld [vmem:[%s1 + $0xe8] sm:$0xff]
  %v68 = vld [vmem:[%s1 + $0xf0] sm:$0xff]
  %v69 = vld [vmem:[%s1 + $0xf8] sm:$0xff]
  %v70 = vld [vmem:[%s1 + $0x100] sm:$0xff]
  %v71 = vld [vmem:[%s1 + $0x108] sm:$0xff]
  %v72 = vld [vmem:[%s1 + $0x110] sm:$0xff]
  %v73 = vld [vmem:[%s1 + $0x118] sm:$0xff]
  %v74 = vld [vmem:[%s1 + $0x120] sm:$0xff]
  %v75 = vld [vmem:[%s1 + $0x128] sm:$0xff]
  %v76 = vld [vmem:[%s1 + $0x130] sm:$0xff]
  %v77 = vld [vmem:[%s1 + $0x138] sm:$0xff]
  %v78 = vld [vmem:[%s1 + $0x140] sm:$0xff]
  %v79 = vld [vmem:[%s1 + $0x148] sm:$0xff]
  %v80 = vld [vmem:[%s1 + $0x150] sm:$0xff]
  %v81 = vld [vmem:[%s1 + $0x158] sm:$0xff]
  %v82 = vld [vmem:[%s1 + $0x160] sm:$0xff]
  %v83 = vld [vmem:[%s1 + $0x168] sm:$0xff]
  %v84 = vld [vmem:[%s1 + $0x170] sm:$0xff]
  %v85 = vld [vmem:[%s1 + $0x178] sm:$0xff]
  %v86 = vld [vmem:[%s2] sm:$0x1]
  %v88 = vperm.slane %v86, 0
  %90 = vmatpush.msra.mxu0 %v53
  %91 = vmatpush.msra.mxu0 %v52
  %92 = vmatpush.msra.mxu0 %v51
  %93 = vmatpush.msra.mxu0 %v50
  %94 = vmatpush.msra.mxu0 %v49
  %95 = vmatpush.msra.mxu0 %v48
  %96 = vmatpush.msra.mxu0 %v47
  %97 = vmatpush.msra.mxu0 %v46
  %98 = vmatpush.msra.mxu0 %v45
  %99 = vmatpush.msra.mxu0 %v44
  %100 = vmatpush.msra.mxu0 %v43
  %101 = vmatpush.msra.mxu0 %v42
  %102 = vmatpush.msra.mxu0 %v41
  %103 = vmatpush.msra.mxu0 %v40
  %104 = vmatpush.msra.mxu0 %v39
  %105 = vmatpush.msra.mxu0 %v38
  %106 = vmatmul.f32.gmra.mxu0 %v30
  %v107 = vpop.f32.mrf.mxu0
  %v108 = vadd.f32 %v88, %v107
  %109 = vmatmul.f32.gmra.mxu0 %v27
  %v110 = vpop.f32.mrf.mxu0
  %v111 = vadd.f32 %v88, %v110
  %112 = vdwg.mxu0
  %113 = vmatpush.msra.mxu0 %v69
  %114 = vmatpush.msra.mxu0 %v68
  %115 = vmatpush.msra.mxu0 %v67
  %116 = vmatpush.msra.mxu0 %v66
  %117 = vmatpush.msra.mxu0 %v65
  %118 = vmatpush.msra.mxu0 %v64
  %119 = vmatpush.msra.mxu0 %v63
  %120 = vmatpush.msra.mxu0 %v62
  %121 = vmatpush.msra.mxu0 %v61
  %122 = vmatpush.msra.mxu0 %v60
  %123 = vmatpush.msra.mxu0 %v59
  %124 = vmatpush.msra.mxu0 %v58
  %125 = vmatpush.msra.mxu0 %v57
  %126 = vmatpush.msra.mxu0 %v56
  %127 = vmatpush.msra.mxu0 %v55
  %128 = vmatpush.msra.mxu0 %v54
  %129 = vmatmul.f32.gmra.mxu0 %v20
  %v130 = vpop.f32.mrf.mxu0
  %v131 = vadd.f32 %v108, %v130
  %132 = vmatmul.f32.gmra.mxu0 %v21
  %v133 = vpop.f32.mrf.mxu0
  %v134 = vadd.f32 %v111, %v133
  %135 = vdwg.mxu0
  %136 = vmatpush.msra.mxu0 %v85
  %137 = vmatpush.msra.mxu0 %v84
  %138 = vmatpush.msra.mxu0 %v83
  %139 = vmatpush.msra.mxu0 %v82
  %140 = vmatpush.msra.mxu0 %v81
  %141 = vmatpush.msra.mxu0 %v80
  %142 = vmatpush.msra.mxu0 %v79
  %143 = vmatpush.msra.mxu0 %v78
  %144 = vmatpush.msra.mxu0 %v77
  %145 = vmatpush.msra.mxu0 %v76
  %146 = vmatpush.msra.mxu0 %v75
  %147 = vmatpush.msra.mxu0 %v74
  %148 = vmatpush.msra.mxu0 %v73
  %149 = vmatpush.msra.mxu0 %v72
  %150 = vmatpush.msra.mxu0 %v71
  %151 = vmatpush.msra.mxu0 %v70
  %152 = vmatmul.f32.gmra.mxu0 %v34
  %v153 = vpop.f32.mrf.mxu0
  %v154 = vadd.f32 %v131, %v153
  %155 = vmatmul.f32.gmra.mxu0 %v37
  %v156 = vpop.f32.mrf.mxu0
  %v157 = vadd.f32 %v134, %v156
  %158 = vdwg.mxu0
  %v159 = vmax.f32 %v154, 0.0
  %v160 = vmax.f32 %v157, 0.0
  %v163 = vrot.slane %v159, 7
  %v164 = vrot.slane %v160, 7
  %v165 = vsel %vm24, %v163, %v164
  %v168 = vsel %vm24, 0.0, %v163
  %v169 = vrot.slane %v159, 1
  %v170 = vrot.slane %v160, 1
  %v171 = vsel %vm31, %v169, %v170
  %v174 = vsel %vm31, %v170, 0.0
  %v175 = vld [vmem:[%s3] sm:$0xff]
  %v176 = vld [vmem:[%s3 + $0x8] sm:$0xff]
  %v177 = vld [vmem:[%s3 + $0x10] sm:$0xff]
  %v178 = vld [vmem:[%s3 + $0x18] sm:$0xff]
  %v179 = vld [vmem:[%s3 + $0x20] sm:$0xff]
  %v180 = vld [vmem:[%s3 + $0x28] sm:$0xff]
  %v181 = vld [vmem:[%s3 + $0x30] sm:$0xff]
  %v182 = vld [vmem:[%s3 + $0x38] sm:$0xff]
  %v183 = vld [vmem:[%s3 + $0x40] sm:$0xff]
  %v184 = vld [vmem:[%s3 + $0x48] sm:$0xff]
  %v185 = vld [vmem:[%s3 + $0x50] sm:$0xff]
  %v186 = vld [vmem:[%s3 + $0x58] sm:$0xff]
  %v187 = vld [vmem:[%s3 + $0x60] sm:$0xff]
  %v188 = vld [vmem:[%s3 + $0x68] sm:$0xff]
  %v189 = vld [vmem:[%s3 + $0x70] sm:$0xff]
  %v190 = vld [vmem:[%s3 + $0x78] sm:$0xff]
  %v191 = vld [vmem:[%s3 + $0x80] sm:$0xff]
  %v192 = vld [vmem:[%s3 + $0x88] sm:$0xff]
  %v193 = vld [vmem:[%s3 + $0x90] sm:$0xff]
  %v194 = vld [vmem:[%s3 + $0x98] sm:$0xff]
  %v195 = vld [vmem:[%s3 + $0xa0] sm:$0xff]
  %v196 = vld [vmem:[%s3 + $0xa8] sm:$0xff]
  %v197 = vld [vmem:[%s3 + $0xb0] sm:$0xff]
  %v198 = vld [vmem:[%s3 + $0xb8] sm:$0xff]
  %v199 = vld [vmem:[%s3 + $0xc0] sm:$0xff]
  %v200 = vld [vmem:[%s3 + $0xc8] sm:$0xff]
  %v201 = vld [vmem:[%s3 + $0xd0] sm:$0xff]
  %v202 = vld [vmem:[%s3 + $0xd8] sm:$0xff]
  %v203 = vld [vmem:[%s3 + $0xe0] sm:$0xff]
  %v204 = vld [vmem:[%s3 + $0xe8] sm:$0xff]
  %v205 = vld [vmem:[%s3 + $0xf0] sm:$0xff]
  %v206 = vld [vmem:[%s3 + $0xf8] sm:$0xff]
  %v207 = vld [vmem:[%s3 + $0x100] sm:$0xff]
  %v208 = vld [vmem:[%s3 + $0x108] sm:$0xff]
  %v209 = vld [vmem:[%s3 + $0x110] sm:$0xff]
  %v210 = vld [vmem:[%s3 + $0x118] sm:$0xff]
  %v211 = vld [vmem:[%s3 + $0x120] sm:$0xff]
  %v212 = vld [vmem:[%s3 + $0x128] sm:$0xff]
  %v213 = vld [vmem:[%s3 + $0x130] sm:$0xff]
  %v214 = vld [vmem:[%s3 + $0x138] sm:$0xff]
  %v215 = vld [vmem:[%s3 + $0x140] sm:$0xff]
  %v216 = vld [vmem:[%s3 + $0x148] sm:$0xff]
  %v217 = vld [vmem:[%s3 + $0x150] sm:$0xff]
  %v218 = vld [vmem:[%s3 + $0x158] sm:$0xff]
  %v219 = vld [vmem:[%s3 + $0x160] sm:$0xff]
  %v220 = vld [vmem:[%s3 + $0x168] sm:$0xff]
  %v221 = vld [vmem:[%s3 + $0x170] sm:$0xff]
  %v222 = vld [vmem:[%s3 + $0x178] sm:$0xff]
  %v223 = vld [vmem:[%s4] sm:$0x1]
  %v225 = vperm.slane %v223, 0
  %227 = vmatpush.msra.mxu0 %v190
  %228 = vmatpush.msra.mxu0 %v189
  %229 = vmatpush.msra.mxu0 %v188
  %230 = vmatpush.msra.mxu0 %v187
  %231 = vmatpush.msra.mxu0 %v186
  %232 = vmatpush.msra.mxu0 %v185
  %233 = vmatpush.msra.mxu0 %v184
  %234 = vmatpush.msra.mxu0 %v183
  %235 = vmatpush.msra.mxu0 %v182
  %236 = vmatpush.msra.mxu0 %v181
  %237 = vmatpush.msra.mxu0 %v180
  %238 = vmatpush.msra.mxu0 %v179
  %239 = vmatpush.msra.mxu0 %v178
  %240 = vmatpush.msra.mxu0 %v177
  %241 = vmatpush.msra.mxu0 %v176
  %242 = vmatpush.msra.mxu0 %v175
  %243 = vmatmul.f32.gmra.mxu0 %v168
  %v244 = vpop.f32.mrf.mxu0
  %v245 = vadd.f32 %v225, %v244
  %246 = vmatmul.f32.gmra.mxu0 %v165
  %v247 = vpop.f32.mrf.mxu0
  %v248 = vadd.f32 %v225, %v247
  %249 = vdwg.mxu0
  %250 = vmatpush.msra.mxu0 %v206
  %251 = vmatpush.msra.mxu0 %v205
  %252 = vmatpush.msra.mxu0 %v204
  %253 = vmatpush.msra.mxu0 %v203
  %254 = vmatpush.msra.mxu0 %v202
  %255 = vmatpush.msra.mxu0 %v201
  %256 = vmatpush.msra.mxu0 %v200
  %257 = vmatpush.msra.mxu0 %v199
  %258 = vmatpush.msra.mxu0 %v198
  %259 = vmatpush.msra.mxu0 %v197
  %260 = vmatpush.msra.mxu0 %v196
  %261 = vmatpush.msra.mxu0 %v195
  %262 = vmatpush.msra.mxu0 %v194
  %263 = vmatpush.msra.mxu0 %v193
  %264 = vmatpush.msra.mxu0 %v192
  %265 = vmatpush.msra.mxu0 %v191
  %266 = vmatmul.f32.gmra.mxu0 %v159
  %v267 = vpop.f32.mrf.mxu0
  %v268 = vadd.f32 %v245, %v267
  %269 = vmatmul.f32.gmra.mxu0 %v160
  %v270 = vpop.f32.mrf.mxu0
  %v271 = vadd.f32 %v248, %v270
  %272 = vdwg.mxu0
  %273 = vmatpush.msra.mxu0 %v222
  %274 = vmatpush.msra.mxu0 %v221
  %275 = vmatpush.msra.mxu0 %v220
  %276 = vmatpush.msra.mxu0 %v219
  %277 = vmatpush.msra.mxu0 %v218
  %278 = vmatpush.msra.mxu0 %v217
  %279 = vmatpush.msra.mxu0 %v216
  %280 = vmatpush.msra.mxu0 %v215
  %281 = vmatpush.msra.mxu0 %v214
  %282 = vmatpush.msra.mxu0 %v213
  %283 = vmatpush.msra.mxu0 %v212
  %284 = vmatpush.msra.mxu0 %v211
  %285 = vmatpush.msra.mxu0 %v210
  %286 = vmatpush.msra.mxu0 %v209
  %287 = vmatpush.msra.mxu0 %v208
  %288 = vmatpush.msra.mxu0 %v207
  %289 = vmatmul.f32.gmra.mxu0 %v171
  %v290 = vpop.f32.mrf.mxu0
  %v291 = vadd.f32 %v268, %v290
  %292 = vmatmul.f32.gmra.mxu0 %v174
  %v293 = vpop.f32.mrf.mxu0
  %v294 = vadd.f32 %v271, %v293
  %295 = vdwg.mxu0
  %v296 = vadd.f32 %v291, %v20
  %v297 = vadd.f32 %v294, %v21
  %298 = vst [vmem:[%s5] sm:$0xff] %v296
  %299 = vst [vmem:[%s5 + $0x8] sm:$0xff] %v297
  // Predicated region
  $region22: #{resblock_forward.1} parent=0 // pred_check
    _
  $region23: #{resblock_forward.1} parent=0 // pred_check_branch
    %301 = sbr.rel (0) target = $region25
  $region24: #{resblock_forward.1} parent=0 // pred_region
    _
  $region25: #{resblock_forward.1} parent=0 // pred_fallthru
    _
  // Predicated region
  $region26: #{resblock_forward.1} parent=0 // pred_check
    _
  $region27: #{resblock_forward.1} parent=0 // pred_check_branch
    %303 = sbr.rel (0) target = $region29
  $region28: #{resblock_forward.1} parent=0 // pred_region
    _
  $region29: #{resblock_forward.1} parent=0 // pred_fallthru
    _

</llo_original>
